<compile_context>
chip_gen: v6e
topology: v6e:2x2x1
jax: 0.10.0
libtpu: 0.0.40
codegen_flags: <defaults>
</compile_context>

<pallas_src>
import jax
import jax.numpy as jnp
from jax.experimental import pallas as pl
from jax.experimental.pallas import tpu as pltpu
import numpy as np

_H = 64  # hidden width


def _cdiv(a, b):
    return -(-a // b)


def _round_up(n, m):
    return _cdiv(n, m) * m


def _mlp_kernel(x_ref, w1_ref, w2_ref, b2_ref, w3_ref, b3_ref, w4_ref, b4_ref,
                o_ref):
    # x_ref : (8, tile_b) f32 -- rows 0:3 = x0^T, rows 3:6 = x1^T,
    #         row 6 = 1.0 (carries the folded layer-1 bias), row 7 = 0.
    #
    # Layer 1 for BOTH inputs + concat + bias as a single MXU matmul:
    #   w1_ref (128, 8) bf16:  rows  0..63  = [ W1(out,in) |     0      | b1 | 0 ]
    #                          rows 64..127 = [     0      | W1(out,in) | b1 | 0 ]
    x = x_ref[...].astype(jnp.bfloat16)
    h = jnp.dot(w1_ref[...], x, preferred_element_type=jnp.float32)  # (128, tile_b)
    h = jnp.maximum(h, 0.0).astype(jnp.bfloat16)

    # Layer 2: the concat is already materialized along sublanes, so this is a
    # single (64,128) x (128,tile_b) bf16 MXU matmul with f32 accumulation.
    h = jnp.dot(w2_ref[...], h, preferred_element_type=jnp.float32)   # (64, tile_b)
    h = jnp.maximum(h + b2_ref[...], 0.0).astype(jnp.bfloat16)

    # Layer 3.
    h = jnp.dot(w3_ref[...], h, preferred_element_type=jnp.float32)   # (64, tile_b)
    h = jnp.maximum(h + b3_ref[...], 0.0)          # keep f32 for the head

    # Layer 4 (out_features == 1): VPU multiply + sublane (XLU) reduce instead
    # of an N=1 MXU matmul.  b4 is a scalar read from SMEM.
    out = jnp.sum(h * w4_ref[...], axis=0, keepdims=True) + b4_ref[0, 0]
    o_ref[...] = out.astype(o_ref.dtype)           # (1, tile_b), lane-dense


def prepare_params(params):
    """One-time packing of PyTorch-style weights into the kernel layout.

    Input weights are stored (in_features, out_features); the kernel uses the
    transposed (out, in) layout with batch in lanes.
    """
    (w1, b1, w2, b2, w3, b3, w4, b4) = params
    H = _H
    # (128, 8): fused layer-1 weight for both inputs, incl. the bias column 6.
    w1c = jnp.zeros((2 * H, 8), jnp.float32)
    w1c = w1c.at[:H, 0:3].set(w1.T)
    w1c = w1c.at[H:, 3:6].set(w1.T)
    w1c = w1c.at[:H, 6].set(b1)
    w1c = w1c.at[H:, 6].set(b1)
    w1c = w1c.astype(jnp.bfloat16)

    w2t = w2.T.astype(jnp.bfloat16)                 # (64, 128) -- merged concat weight
    b2c = b2.reshape(H, 1).astype(jnp.float32)
    w3t = w3.T.astype(jnp.bfloat16)                 # (64, 64)
    b3c = b3.reshape(H, 1).astype(jnp.float32)
    w4c = w4.reshape(H, 1).astype(jnp.float32)      # (64, 1) column for the lane-wise head
    b4s = b4.reshape(1, 1).astype(jnp.float32)      # scalar -> SMEM
    return (w1c, w2t, b2c, w3t, b3c, w4c, b4s)


def _choose_tiling(B, *, max_block_rows, min_steps):
    """Pick (tile_b, n_steps): lane-multiple tile, >=min_steps steps when
    possible (v7x megacore), minimal batch padding, capped per-step VMEM."""
    Bp128 = _round_up(B, 128)
    n_groups = Bp128 // 128                       # number of 128-row lane groups
    n_steps = max(min_steps, _cdiv(Bp128, max_block_rows))
    n_steps = max(1, min(n_steps, n_groups))      # never create empty steps
    tile_b = _round_up(_cdiv(Bp128, n_steps), 128)
    n_steps = _cdiv(Bp128, tile_b)
    return tile_b, n_steps


def mlp_forward(x0, x1, prepped_params, *, max_block_rows=8192, min_grid_steps=2):
    """Full forward pass of the geodesics MLP in one Pallas kernel.

    x0, x1: (B, 3) float32.  prepped_params from prepare_params().
    Returns (B, 1) float32.
    """
    (w1c, w2t, b2c, w3t, b3c, w4c, b4s) = prepped_params
    B = x0.shape[0]
    H = _H

    tile_b, n_steps = _choose_tiling(
        B, max_block_rows=max_block_rows, min_steps=min_grid_steps)
    Bp = tile_b * n_steps

    # Pack both inputs (transposed, batch-in-lanes) plus the ones-row for the
    # folded layer-1 bias into a single lane-dense (8, Bp) f32 operand.
    # TODO(synk): a caller that already stores coordinates feature-major could
    # hand this slab in directly and skip the extra HBM relayout pass.
    xcat = jnp.zeros((8, Bp), jnp.float32)
    xcat = xcat.at[0:3, :B].set(x0.T)
    xcat = xcat.at[3:6, :B].set(x1.T)
    xcat = xcat.at[6, :].set(1.0)

    batch_map = lambda i: (0, i)
    const_map = lambda i: (0, 0)

    out = pl.pallas_call(
        _mlp_kernel,
        out_shape=jax.ShapeDtypeStruct((1, Bp), jnp.float32),
        grid=(n_steps,),
        in_specs=[
            pl.BlockSpec((8, tile_b), batch_map),               # packed x0^T/x1^T/ones
            pl.BlockSpec((2 * H, 8), const_map),                # fused W1 (+b1), bf16
            pl.BlockSpec((H, 2 * H), const_map),                # merged W2^T, bf16
            pl.BlockSpec((H, 1), const_map),                    # b2 column
            pl.BlockSpec((H, H), const_map),                    # W3^T, bf16
            pl.BlockSpec((H, 1), const_map),                    # b3 column
            pl.BlockSpec((H, 1), const_map),                    # W4 column
            pl.BlockSpec(memory_space=pltpu.MemorySpace.SMEM),  # b4 scalar
        ],
        out_specs=pl.BlockSpec((1, tile_b), batch_map),
        compiler_params=pltpu.CompilerParams(
            dimension_semantics=("parallel",),
            # Explicit scoped-VMEM budget: safe on v5e/v6e (128 MiB physical)
            # and v7x (64 MiB physical); lets tile_b grow past the defaults.
            vmem_limit_bytes=48 * 1024 * 1024),
    )(xcat, w1c, w2t, b2c, w3t, b3c, w4c, b4s)

    return out[0, :B].reshape(B, 1)


def init_params(key):
    """Deterministic PyTorch-style (uniform fan_in) Linear init, weights stored (in, out)."""
    def linear(key, fan_in, fan_out):
        kw, kb = jax.random.split(key)
        bound = 1.0 / np.sqrt(fan_in)
        w = jax.random.uniform(kw, (fan_in, fan_out), jnp.float32, -bound, bound)
        b = jax.random.uniform(kb, (fan_out,), jnp.float32, -bound, bound)
        return w, b

    k1, k2, k3, k4 = jax.random.split(key, 4)
    w1, b1 = linear(k1, 3, 64)
    w2, b2 = linear(k2, 128, 64)
    w3, b3 = linear(k3, 64, 64)
    w4, b4 = linear(k4, 64, 1)
    return (w1, b1, w2, b2, w3, b3, w4, b4)


def reference_forward_f32(x0, x1, params):
    """Pure-f32 reference equal to the PyTorch module."""
    (w1, b1, w2, b2, w3, b3, w4, b4) = params
    h0 = jax.nn.relu(x0 @ w1 + b1)
    h1 = jax.nn.relu(x1 @ w1 + b1)
    h = jnp.concatenate([h0, h1], axis=1)
    h = jax.nn.relu(h @ w2 + b2)
    h = jax.nn.relu(h @ w3 + b3)
    return h @ w4 + b4


def reference_forward_bf16(x0, x1, params):
    """Reference that mirrors the kernel's bf16 rounding (x, W1, b1, W2, W3 in bf16,
    f32 accumulation, f32 b2/b3 adds, f32 head)."""
    (w1, b1, w2, b2, w3, b3, w4, b4) = params
    bf = jnp.bfloat16

    def layer1(x):
        h = jnp.dot(x.astype(bf), w1.astype(bf), preferred_element_type=jnp.float32)
        h = h + b1.astype(bf).astype(jnp.float32)
        return jax.nn.relu(h).astype(bf)

    h = jnp.concatenate([layer1(x0), layer1(x1)], axis=1)
    h = jnp.dot(h, w2.astype(bf), preferred_element_type=jnp.float32)
    h = jax.nn.relu(h + b2).astype(bf)
    h = jnp.dot(h, w3.astype(bf), preferred_element_type=jnp.float32)
    h = jax.nn.relu(h + b3)
    return jnp.sum(h * w4[:, 0][None, :], axis=1, keepdims=True) + b4


if __name__ == "__main__":
    key = jax.random.PRNGKey(0)
    kp, kx0, kx1 = jax.random.split(key, 3)

    params = init_params(kp)
    prepped = prepare_params(params)   # hoisted one-time weight packing

    B = 8
    x0 = jax.random.normal(kx0, (B, 3), jnp.float32)
    x1 = jax.random.normal(kx1, (B, 3), jnp.float32)

    out = mlp_forward(x0, x1, prepped)
    out = jax.block_until_ready(out)
    assert out.shape == (B, 1)

    # Tight check vs. a reference that applies the same bf16 rounding.
    ref_bf16 = reference_forward_bf16(x0, x1, params)
    np.testing.assert_allclose(np.asarray(out), np.asarray(ref_bf16),
                               rtol=5e-3, atol=5e-3)
    # Loose check vs. the pure-f32 PyTorch-equivalent reference.
    ref_f32 = reference_forward_f32(x0, x1, params)
    np.testing.assert_allclose(np.asarray(out), np.asarray(ref_f32),
                               rtol=5e-2, atol=5e-2)

    print("KERNEL_OK")
</pallas_src>

<mosaic_0001>
module attributes {stable_mosaic.version = 11 : i64} {
  func.func @_mlp_kernel(%arg0: i32, %arg1: memref<8x128xf32, #tpu.memory_space<vmem>>, %arg2: memref<128x8xbf16, #tpu.memory_space<vmem>>, %arg3: memref<64x128xbf16, #tpu.memory_space<vmem>>, %arg4: memref<64x1xf32, #tpu.memory_space<vmem>>, %arg5: memref<64x64xbf16, #tpu.memory_space<vmem>>, %arg6: memref<64x1xf32, #tpu.memory_space<vmem>>, %arg7: memref<64x1xf32, #tpu.memory_space<vmem>>, %arg8: memref<1x1xf32, #tpu.memory_space<smem>>, %arg9: memref<1x128xf32, #tpu.memory_space<vmem>>) attributes {dimension_semantics = [#tpu.dimension_semantics<parallel>], iteration_bounds = array<i64: 1>, scalar_prefetch = 0 : i64, scratch_operands = 0 : i64, tpu.core_type = #tpu.core_type<tc>, window_params = [{transform_indices = @transform_0, window_bounds = array<i64: 8, 128>}, {pipeline_mode = #tpu.pipeline_mode<synchronous>, transform_indices = @transform_1, window_bounds = array<i64: 128, 8>}, {pipeline_mode = #tpu.pipeline_mode<synchronous>, transform_indices = @transform_2, window_bounds = array<i64: 64, 128>}, {pipeline_mode = #tpu.pipeline_mode<synchronous>, transform_indices = @transform_3, window_bounds = array<i64: 64, 1>}, {pipeline_mode = #tpu.pipeline_mode<synchronous>, transform_indices = @transform_4, window_bounds = array<i64: 64, 64>}, {pipeline_mode = #tpu.pipeline_mode<synchronous>, transform_indices = @transform_5, window_bounds = array<i64: 64, 1>}, {pipeline_mode = #tpu.pipeline_mode<synchronous>, transform_indices = @transform_6, window_bounds = array<i64: 64, 1>}, {transform_indices = @transform_7, window_bounds = array<i64: 1, 1>}, {transform_indices = @transform_8, window_bounds = array<i64: 1, 128>}]} {
    %c0 = arith.constant 0 : index
    %c0_0 = arith.constant 0 : index
    %0 = vector.load %arg1[%c0, %c0_0] : memref<8x128xf32, #tpu.memory_space<vmem>>, vector<8x128xf32>
    %1 = arith.truncf %0 : vector<8x128xf32> to vector<8x128xbf16>
    %c0_1 = arith.constant 0 : index
    %c0_2 = arith.constant 0 : index
    %2 = vector.load %arg2[%c0_1, %c0_2] : memref<128x8xbf16, #tpu.memory_space<vmem>>, vector<128x8xbf16>
    %cst = arith.constant dense<0.000000e+00> : vector<128x128xf32>
    %3 = tpu.matmul %2, %1, %cst {dimension_numbers = #tpu.dot_dimension_numbers<[1], [0], [0], [1], [0, 0, 1, 1], [], []>} : vector<128x8xbf16>, vector<8x128xbf16>, vector<128x128xf32> -> vector<128x128xf32>
    %cst_3 = arith.constant 0.000000e+00 : f32
    %4 = vector.broadcast %cst_3 : f32 to vector<128x128xf32>
    %5 = arith.maximumf %3, %4 : vector<128x128xf32>
    %6 = arith.truncf %5 : vector<128x128xf32> to vector<128x128xbf16>
    %c0_4 = arith.constant 0 : index
    %c0_5 = arith.constant 0 : index
    %7 = vector.load %arg3[%c0_4, %c0_5] : memref<64x128xbf16, #tpu.memory_space<vmem>>, vector<64x128xbf16>
    %cst_6 = arith.constant dense<0.000000e+00> : vector<64x128xf32>
    %8 = tpu.matmul %7, %6, %cst_6 {dimension_numbers = #tpu.dot_dimension_numbers<[1], [0], [0], [1], [0, 0, 1, 1], [], []>} : vector<64x128xbf16>, vector<128x128xbf16>, vector<64x128xf32> -> vector<64x128xf32>
    %c0_7 = arith.constant 0 : index
    %c0_8 = arith.constant 0 : index
    %9 = vector.load %arg4[%c0_7, %c0_8] : memref<64x1xf32, #tpu.memory_space<vmem>>, vector<64x1xf32>
    %10 = vector.broadcast %9 : vector<64x1xf32> to vector<64x128xf32>
    %11 = arith.addf %8, %10 : vector<64x128xf32>
    %cst_9 = arith.constant 0.000000e+00 : f32
    %12 = vector.broadcast %cst_9 : f32 to vector<64x128xf32>
    %13 = arith.maximumf %11, %12 : vector<64x128xf32>
    %14 = arith.truncf %13 : vector<64x128xf32> to vector<64x128xbf16>
    %c0_10 = arith.constant 0 : index
    %c0_11 = arith.constant 0 : index
    %15 = vector.load %arg5[%c0_10, %c0_11] : memref<64x64xbf16, #tpu.memory_space<vmem>>, vector<64x64xbf16>
    %cst_12 = arith.constant dense<0.000000e+00> : vector<64x128xf32>
    %16 = tpu.matmul %15, %14, %cst_12 {dimension_numbers = #tpu.dot_dimension_numbers<[1], [0], [0], [1], [0, 0, 1, 1], [], []>} : vector<64x64xbf16>, vector<64x128xbf16>, vector<64x128xf32> -> vector<64x128xf32>
    %c0_13 = arith.constant 0 : index
    %c0_14 = arith.constant 0 : index
    %17 = vector.load %arg6[%c0_13, %c0_14] : memref<64x1xf32, #tpu.memory_space<vmem>>, vector<64x1xf32>
    %18 = vector.broadcast %17 : vector<64x1xf32> to vector<64x128xf32>
    %19 = arith.addf %16, %18 : vector<64x128xf32>
    %cst_15 = arith.constant 0.000000e+00 : f32
    %20 = vector.broadcast %cst_15 : f32 to vector<64x128xf32>
    %21 = arith.maximumf %19, %20 : vector<64x128xf32>
    %c0_16 = arith.constant 0 : index
    %c0_17 = arith.constant 0 : index
    %22 = vector.load %arg7[%c0_16, %c0_17] : memref<64x1xf32, #tpu.memory_space<vmem>>, vector<64x1xf32>
    %23 = vector.broadcast %22 : vector<64x1xf32> to vector<64x128xf32>
    %24 = arith.mulf %21, %23 : vector<64x128xf32>
    %cst_18 = arith.constant dense<0.000000e+00> : vector<128xf32>
    %25 = vector.multi_reduction <add>, %24, %cst_18 [0] : vector<64x128xf32> to vector<128xf32>
    %26 = vector.shape_cast %25 : vector<128xf32> to vector<1x128xf32>
    %c0_19 = arith.constant 0 : index
    %c0_20 = arith.constant 0 : index
    %27 = memref.load %arg8[%c0_19, %c0_20] : memref<1x1xf32, #tpu.memory_space<smem>>
    %28 = vector.broadcast %27 : f32 to vector<1x128xf32>
    %29 = arith.addf %26, %28 : vector<1x128xf32>
    %c0_21 = arith.constant 0 : index
    %c0_22 = arith.constant 0 : index
    %30 = vector.load %arg9[%c0_21, %c0_22] : memref<1x128xf32, #tpu.memory_space<vmem>>, vector<1x128xf32>
    tpu.vector_store %arg9[%c0_21, %c0_22], %29 {strides = array<i32>} : memref<1x128xf32, #tpu.memory_space<vmem>>, vector<1x128xf32>,
    return
  }
  func.func @transform_0(%arg0: i32) -> (i32, i32) {
    %c0_i32 = arith.constant 0 : i32
    %c0_i32_0 = arith.constant 0 : i32
    return %c0_i32, %arg0 : i32, i32
  }
  func.func @transform_1(%arg0: i32) -> (i32, i32) {
    %c0_i32 = arith.constant 0 : i32
    %c0_i32_0 = arith.constant 0 : i32
    %c0_i32_1 = arith.constant 0 : i32
    return %c0_i32, %c0_i32_0 : i32, i32
  }
  func.func @transform_2(%arg0: i32) -> (i32, i32) {
    %c0_i32 = arith.constant 0 : i32
    %c0_i32_0 = arith.constant 0 : i32
    %c0_i32_1 = arith.constant 0 : i32
    return %c0_i32, %c0_i32_0 : i32, i32
  }
  func.func @transform_3(%arg0: i32) -> (i32, i32) {
    %c0_i32 = arith.constant 0 : i32
    %c0_i32_0 = arith.constant 0 : i32
    %c0_i32_1 = arith.constant 0 : i32
    return %c0_i32, %c0_i32_0 : i32, i32
  }
  func.func @transform_4(%arg0: i32) -> (i32, i32) {
    %c0_i32 = arith.constant 0 : i32
    %c0_i32_0 = arith.constant 0 : i32
    %c0_i32_1 = arith.constant 0 : i32
    return %c0_i32, %c0_i32_0 : i32, i32
  }
  func.func @transform_5(%arg0: i32) -> (i32, i32) {
    %c0_i32 = arith.constant 0 : i32
    %c0_i32_0 = arith.constant 0 : i32
    %c0_i32_1 = arith.constant 0 : i32
    return %c0_i32, %c0_i32_0 : i32, i32
  }
  func.func @transform_6(%arg0: i32) -> (i32, i32) {
    %c0_i32 = arith.constant 0 : i32
    %c0_i32_0 = arith.constant 0 : i32
    %c0_i32_1 = arith.constant 0 : i32
    return %c0_i32, %c0_i32_0 : i32, i32
  }
  func.func @transform_7(%arg0: i32) -> (i32, i32) {
    %c0_i32 = arith.constant 0 : i32
    %c0_i32_0 = arith.constant 0 : i32
    %c0_i32_1 = arith.constant 0 : i32
    return %c0_i32, %c0_i32_0 : i32, i32
  }
  func.func @transform_8(%arg0: i32) -> (i32, i32) {
    %c0_i32 = arith.constant 0 : i32
    %c0_i32_0 = arith.constant 0 : i32
    return %c0_i32, %arg0 : i32, i32
  }
}

</mosaic_0001>

<llo_original>
// kernel: tpu_custom_call.1
$region0: #{tpu_custom_call.1}
  #allocation0 [shape = 'u32[]', space=smem, size = 0x4, offset = 0x4, fixed_abs, tag = 'smem constant byte address 0x4 - core index']
  #allocation1 [shape = 'u32[144,128]{1,0:T(1,128)}', space=vmem, size = 0x12000, scoped, tag = 'internal scratch']
  #allocation2 [shape = 'f32[1,1]{1,0:T(1,128)S(6)}', space=smem, size = 0x200, scoped, tag = 'scoped memory for tpu_custom_call.1']
  %s0 = inlined_call_operand.vmem [shape: f32[8,128], index: 0, kind: input, shape index: {}]
  %s1 = inlined_call_operand.vmem [shape: bf16[128,8], index: 1, kind: input, shape index: {}]
  %s2 = inlined_call_operand.vmem [shape: bf16[64,128], index: 2, kind: input, shape index: {}]
  %s3 = inlined_call_operand.vmem [shape: f32[64,1], index: 3, kind: input, shape index: {}]
  %s4 = inlined_call_operand.vmem [shape: bf16[64,64], index: 4, kind: input, shape index: {}]
  %s5 = inlined_call_operand.vmem [shape: f32[64,1], index: 5, kind: input, shape index: {}]
  %s6 = inlined_call_operand.vmem [shape: f32[64,1], index: 6, kind: input, shape index: {}]
  %s7 = inlined_call_operand.<no memory space> [shape: f32[1,1], index: 7, kind: input, shape index: {}]
  %s8 = inlined_call_operand.hbm [shape: f32[1,128], index: 8, kind: output, shape index: {}]
  %s9 = sld [smem:[#allocation0]]
  $region42: #{tpu_custom_call.1} parent=0
    _
  %s11 = ssub.s32 1, %s9
  %s12 = scalar_select 0, %s11, %s9
  %13 = sst [smem:[#allocation2]] %s7
  $region1: #{tpu_custom_call.1} parent=0
    #allocation3 [shape = 'u8[512]{0}', space=vmem, size = 0x400, scoped, tag = 'output window, operand 0, single buffered']
    #allocation4 [shape = 's32[1]{0}', space=sflag, size = 0x4, scoped, tag = 'scoped memory for tpu_custom_call.1']
    %14 = vsyncpa [#allocation4], 0
    // Predicated region
    $region2: #{tpu_custom_call.1} parent=1 // pred_check
      _
    $region3: #{tpu_custom_call.1} parent=1 // pred_check_branch
      %16 = sbr.rel (0) target = $region5
    $region4: #{tpu_custom_call.1} parent=1 // pred_region
      _
    $region5: #{tpu_custom_call.1} parent=1 // pred_fallthru
      _
    // Predicated region
    $region6: #{tpu_custom_call.1} parent=1 // pred_check
      _
    $region7: #{tpu_custom_call.1} parent=1 // pred_check_branch
      %18 = sbr.rel (0) target = $region9
    $region8: #{tpu_custom_call.1} parent=1 // pred_region
      _
    $region9: #{tpu_custom_call.1} parent=1 // pred_fallthru
      _
    // Predicated region
    $region10: #{tpu_custom_call.1} parent=1 // pred_check
      _
    $region11: #{tpu_custom_call.1} parent=1 // pred_check_branch
      %20 = sbr.rel (0) target = $region13
    $region12: #{tpu_custom_call.1} parent=1 // pred_region
      _
    $region13: #{tpu_custom_call.1} parent=1 // pred_fallthru
      _
    // Predicated region
    $region14: #{tpu_custom_call.1} parent=1 // pred_check
      _
    $region15: #{tpu_custom_call.1} parent=1 // pred_check_branch
      %22 = sbr.rel (0) target = $region17
    $region16: #{tpu_custom_call.1} parent=1 // pred_region
      _
    $region17: #{tpu_custom_call.1} parent=1 // pred_fallthru
      _
    // Predicated region
    $region18: #{tpu_custom_call.1} parent=1 // pred_check
      _
    $region19: #{tpu_custom_call.1} parent=1 // pred_check_branch
      %24 = sbr.rel (0) target = $region21
    $region20: #{tpu_custom_call.1} parent=1 // pred_region
      _
    $region21: #{tpu_custom_call.1} parent=1 // pred_fallthru
      _
    // Predicated region
    $region22: #{tpu_custom_call.1} parent=1 // pred_check
      _
    $region23: #{tpu_custom_call.1} parent=1 // pred_check_branch
      %26 = sbr.rel (0) target = $region25
    $region24: #{tpu_custom_call.1} parent=1 // pred_region
      _
    $region25: #{tpu_custom_call.1} parent=1 // pred_fallthru
      _
    // Predicated region
    $region26: #{tpu_custom_call.1} parent=1 // pred_check
      _
    $region27: #{tpu_custom_call.1} parent=1 // pred_check_branch
      %28 = sbr.rel (0) target = $region29
    $region28: #{tpu_custom_call.1} parent=1 // pred_region
      _
    $region29: #{tpu_custom_call.1} parent=1 // pred_fallthru
      _
    // Predicated region
    $region30: #{tpu_custom_call.1} parent=1 // pred_check
      _
    $region31: #{tpu_custom_call.1} parent=1 // pred_check_branch
      %30 = sbr.rel (0) target = $region33
    $region32: #{tpu_custom_call.1} parent=1 // pred_region
      _
    $region33: #{tpu_custom_call.1} parent=1 // pred_fallthru
      _
    %v32 = vld [vmem:[%s0] sm:$0xff]
    %v33 = vpack.c.bf16 %v32, %v32
    %v34 = vld [vmem:[%s1] sm:$0xf]
    %v35 = vld [vmem:[%s1 + $0x4] sm:$0xf]
    %v36 = vld [vmem:[%s1 + $0x8] sm:$0xf]
    %v37 = vld [vmem:[%s1 + $0xc] sm:$0xf]
    %v38 = vld [vmem:[%s1 + $0x10] sm:$0xf]
    %v39 = vld [vmem:[%s1 + $0x14] sm:$0xf]
    %v40 = vld [vmem:[%s1 + $0x18] sm:$0xf]
    %v41 = vld [vmem:[%s1 + $0x1c] sm:$0xf]
    %v42 = vld [vmem:[%s1 + $0x20] sm:$0xf]
    %v43 = vld [vmem:[%s1 + $0x24] sm:$0xf]
    %v44 = vld [vmem:[%s1 + $0x28] sm:$0xf]
    %v45 = vld [vmem:[%s1 + $0x2c] sm:$0xf]
    %v46 = vld [vmem:[%s1 + $0x30] sm:$0xf]
    %v47 = vld [vmem:[%s1 + $0x34] sm:$0xf]
    %v48 = vld [vmem:[%s1 + $0x38] sm:$0xf]
    %v49 = vld [vmem:[%s1 + $0x3c] sm:$0xf]
    %v66 = vunpack.c.l.b16 %v34
    %v67 = vunpack.c.l.b16 %v35
    %v68 = vunpack.c.l.b16 %v36
    %v69 = vunpack.c.l.b16 %v37
    %v70 = vunpack.c.l.b16 %v38
    %v71 = vunpack.c.l.b16 %v39
    %v72 = vunpack.c.l.b16 %v40
    %v73 = vunpack.c.l.b16 %v41
    %v74 = vunpack.c.l.b16 %v42
    %v75 = vunpack.c.l.b16 %v43
    %v76 = vunpack.c.l.b16 %v44
    %v77 = vunpack.c.l.b16 %v45
    %v78 = vunpack.c.l.b16 %v46
    %v79 = vunpack.c.l.b16 %v47
    %v80 = vunpack.c.l.b16 %v48
    %v81 = vunpack.c.l.b16 %v49
    %v82 = vpack.c.b16 %v67, %v66
    %v83 = vpack.c.b16 %v69, %v68
    %v84 = vpack.c.b16 %v71, %v70
    %v85 = vpack.c.b16 %v73, %v72
    %v86 = vpack.c.b16 %v75, %v74
    %v87 = vpack.c.b16 %v77, %v76
    %v88 = vpack.c.b16 %v79, %v78
    %v89 = vpack.c.b16 %v81, %v80
    %vm90 = vcmask 64512
    %v92 = vsel %vm90, %v82, 0
    %v95 = vsel %vm90, %v83, 0
    %v98 = vsel %vm90, %v84, 0
    %v101 = vsel %vm90, %v85, 0
    %v104 = vsel %vm90, %v86, 0
    %v107 = vsel %vm90, %v87, 0
    %v110 = vsel %vm90, %v88, 0
    %v113 = vsel %vm90, %v89, 0
    %vm115 = vcmask 1043456
    %v117 = vsel %vm115, %v33, 0
    %119 = vmatprep.subr.bf16.mxu0 0
    %120 = vmatpush1.bf16.msra.mxu0 0
    %121 = vmatprep.subr.bf16.mxu0 0
    %122 = vmatpush1.bf16.msra.mxu0 0
    %123 = vmatprep.subr.bf16.mxu0 0
    %124 = vmatpush1.bf16.msra.mxu0 0
    %125 = vmatprep.subr.bf16.mxu0 0
    %126 = vmatpush1.bf16.msra.mxu0 0
    %127 = vmatprep.subr.bf16.mxu0 0
    %128 = vmatpush1.bf16.msra.mxu0 0
    %129 = vmatprep.subr.bf16.mxu0 0
    %130 = vmatpush1.bf16.msra.mxu0 0
    %131 = vmatprep.subr.bf16.mxu0 0
    %132 = vmatpush1.bf16.msra.mxu0 0
    %133 = vmatprep.subr.bf16.mxu0 0
    %134 = vmatpush1.bf16.msra.mxu0 %v117
    %135 = vmatprep.subr.bf16.mxu0 0
    %136 = vmatpush2.bf16.msra.mxu0 0
    %137 = vmatprep.subr.bf16.mxu0 0
    %138 = vmatpush2.bf16.msra.mxu0 0
    %139 = vmatprep.subr.bf16.mxu0 0
    %140 = vmatpush2.bf16.msra.mxu0 0
    %141 = vmatprep.subr.bf16.mxu0 0
    %142 = vmatpush2.bf16.msra.mxu0 0
    %143 = vmatprep.subr.bf16.mxu0 0
    %144 = vmatpush2.bf16.msra.mxu0 0
    %145 = vmatprep.subr.bf16.mxu0 0
    %146 = vmatpush2.bf16.msra.mxu0 0
    %147 = vmatprep.subr.bf16.mxu0 0
    %148 = vmatpush2.bf16.msra.mxu0 0
    %149 = vmatprep.subr.bf16.mxu0 0
    %150 = vmatpush2.bf16.msra.mxu0 0
    %151 = vmatprep.mubr.bf16.mxu0 0
    %152 = vmatmul.mubr.bf16.gmra.mxu0 %v92
    %v153 = vpop.f32.mrf.mxu0
    %v154 = vadd.f32 0.0, %v153
    %v155 = vpop.f32.mrf.mxu0
    %v156 = vpop.f32.mrf.mxu0
    %v157 = vadd.f32 0.0, %v156
    %v158 = vpop.f32.mrf.mxu0
    %159 = vmatprep.mubr.bf16.mxu0 0
    %160 = vmatmul.mubr.bf16.gmra.mxu0 %v95
    %v161 = vpop.f32.mrf.mxu0
    %v162 = vadd.f32 0.0, %v161
    %v163 = vpop.f32.mrf.mxu0
    %v164 = vpop.f32.mrf.mxu0
    %v165 = vadd.f32 0.0, %v164
    %v166 = vpop.f32.mrf.mxu0
    %167 = vmatprep.mubr.bf16.mxu0 0
    %168 = vmatmul.mubr.bf16.gmra.mxu0 %v98
    %v169 = vpop.f32.mrf.mxu0
    %v170 = vadd.f32 0.0, %v169
    %v171 = vpop.f32.mrf.mxu0
    %v172 = vpop.f32.mrf.mxu0
    %v173 = vadd.f32 0.0, %v172
    %v174 = vpop.f32.mrf.mxu0
    %175 = vmatprep.mubr.bf16.mxu0 0
    %176 = vmatmul.mubr.bf16.gmra.mxu0 %v101
    %v177 = vpop.f32.mrf.mxu0
    %v178 = vadd.f32 0.0, %v177
    %v179 = vpop.f32.mrf.mxu0
    %v180 = vpop.f32.mrf.mxu0
    %v181 = vadd.f32 0.0, %v180
    %v182 = vpop.f32.mrf.mxu0
    %183 = vmatprep.mubr.bf16.mxu0 0
    %184 = vmatmul.mubr.bf16.gmra.mxu0 %v104
    %v185 = vpop.f32.mrf.mxu0
    %v186 = vadd.f32 0.0, %v185
    %v187 = vpop.f32.mrf.mxu0
    %v188 = vpop.f32.mrf.mxu0
    %v189 = vadd.f32 0.0, %v188
    %v190 = vpop.f32.mrf.mxu0
    %191 = vmatprep.mubr.bf16.mxu0 0
    %192 = vmatmul.mubr.bf16.gmra.mxu0 %v107
    %v193 = vpop.f32.mrf.mxu0
    %v194 = vadd.f32 0.0, %v193
    %v195 = vpop.f32.mrf.mxu0
    %v196 = vpop.f32.mrf.mxu0
    %v197 = vadd.f32 0.0, %v196
    %v198 = vpop.f32.mrf.mxu0
    %199 = vmatprep.mubr.bf16.mxu0 0
    %200 = vmatmul.mubr.bf16.gmra.mxu0 %v110
    %v201 = vpop.f32.mrf.mxu0
    %v202 = vadd.f32 0.0, %v201
    %v203 = vpop.f32.mrf.mxu0
    %v204 = vpop.f32.mrf.mxu0
    %v205 = vadd.f32 0.0, %v204
    %v206 = vpop.f32.mrf.mxu0
    %207 = vmatprep.mubr.bf16.mxu0 0
    %208 = vmatmul.mubr.bf16.gmra.mxu0 %v113
    %v209 = vpop.f32.mrf.mxu0
    %v210 = vadd.f32 0.0, %v209
    %v211 = vpop.f32.mrf.mxu0
    %v212 = vpop.f32.mrf.mxu0
    %v213 = vadd.f32 0.0, %v212
    %v214 = vpop.f32.mrf.mxu0
    %215 = vdwg.mxu0
    %v216 = vmax.f32 %v154, 0.0
    %v217 = vmax.f32 %v157, 0.0
    %v218 = vmax.f32 %v162, 0.0
    %v219 = vmax.f32 %v165, 0.0
    %v220 = vmax.f32 %v170, 0.0
    %v221 = vmax.f32 %v173, 0.0
    %v222 = vmax.f32 %v178, 0.0
    %v223 = vmax.f32 %v181, 0.0
    %v224 = vmax.f32 %v186, 0.0
    %v225 = vmax.f32 %v189, 0.0
    %v226 = vmax.f32 %v194, 0.0
    %v227 = vmax.f32 %v197, 0.0
    %v228 = vmax.f32 %v202, 0.0
    %v229 = vmax.f32 %v205, 0.0
    %v230 = vmax.f32 %v210, 0.0
    %v231 = vmax.f32 %v213, 0.0
    %v232 = vpack.c.bf16 %v217, %v216
    %v233 = vpack.c.bf16 %v219, %v218
    %v234 = vpack.c.bf16 %v221, %v220
    %v235 = vpack.c.bf16 %v223, %v222
    %v236 = vpack.c.bf16 %v225, %v224
    %v237 = vpack.c.bf16 %v227, %v226
    %v238 = vpack.c.bf16 %v229, %v228
    %v239 = vpack.c.bf16 %v231, %v230
    %v240 = vld [vmem:[%s2] sm:$0xf]
    %v241 = vld [vmem:[%s2 + $0x4] sm:$0xf]
    %v242 = vld [vmem:[%s2 + $0x8] sm:$0xf]
    %v243 = vld [vmem:[%s2 + $0xc] sm:$0xf]
    %v244 = vld [vmem:[%s2 + $0x10] sm:$0xf]
    %v245 = vld [vmem:[%s2 + $0x14] sm:$0xf]
    %v246 = vld [vmem:[%s2 + $0x18] sm:$0xf]
    %v247 = vld [vmem:[%s2 + $0x1c] sm:$0xf]
    %v248 = vld [vmem:[%s3] sm:$0xff]
    %v249 = vld [vmem:[%s3 + $0x8] sm:$0xff]
    %v250 = vld [vmem:[%s3 + $0x10] sm:$0xff]
    %v251 = vld [vmem:[%s3 + $0x18] sm:$0xff]
    %v252 = vld [vmem:[%s3 + $0x20] sm:$0xff]
    %v253 = vld [vmem:[%s3 + $0x28] sm:$0xff]
    %v254 = vld [vmem:[%s3 + $0x30] sm:$0xff]
    %v255 = vld [vmem:[%s3 + $0x38] sm:$0xff]
    %257 = vset.pattern.permute.xlu0 0
    %258 = vperm.xlu0 %257, %v248
    %v259 = vpop.permute.xlu0 %258
    %262 = vset.pattern.permute.xlu0 0
    %263 = vperm.xlu0 %262, %v249
    %v264 = vpop.permute.xlu0 %263
    %267 = vset.pattern.permute.xlu0 0
    %268 = vperm.xlu0 %267, %v250
    %v269 = vpop.permute.xlu0 %268
    %272 = vset.pattern.permute.xlu0 0
    %273 = vperm.xlu0 %272, %v251
    %v274 = vpop.permute.xlu0 %273
    %277 = vset.pattern.permute.xlu0 0
    %278 = vperm.xlu0 %277, %v252
    %v279 = vpop.permute.xlu0 %278
    %282 = vset.pattern.permute.xlu0 0
    %283 = vperm.xlu0 %282, %v253
    %v284 = vpop.permute.xlu0 %283
    %287 = vset.pattern.permute.xlu0 0
    %288 = vperm.xlu0 %287, %v254
    %v289 = vpop.permute.xlu0 %288
    %292 = vset.pattern.permute.xlu0 0
    %293 = vperm.xlu0 %292, %v255
    %v294 = vpop.permute.xlu0 %293
    %v304 = vunpack.c.l.b16 %v240
    %v305 = vunpack.c.l.b16 %v241
    %v306 = vunpack.c.l.b16 %v242
    %v307 = vunpack.c.l.b16 %v243
    %v308 = vunpack.c.l.b16 %v244
    %v309 = vunpack.c.l.b16 %v245
    %v310 = vunpack.c.l.b16 %v246
    %v311 = vunpack.c.l.b16 %v247
    %v312 = vpack.c.b16 %v305, %v304
    %v313 = vpack.c.b16 %v307, %v306
    %v314 = vpack.c.b16 %v309, %v308
    %v315 = vpack.c.b16 %v311, %v310
    %320 = vmatprep.subr.bf16.mxu0 0
    %321 = vmatpush1.bf16.msra.mxu0 %v239
    %322 = vmatprep.subr.bf16.mxu0 0
    %323 = vmatpush1.bf16.msra.mxu0 %v238
    %324 = vmatprep.subr.bf16.mxu0 0
    %325 = vmatpush1.bf16.msra.mxu0 %v237
    %326 = vmatprep.subr.bf16.mxu0 0
    %327 = vmatpush1.bf16.msra.mxu0 %v236
    %328 = vmatprep.subr.bf16.mxu0 0
    %329 = vmatpush1.bf16.msra.mxu0 %v235
    %330 = vmatprep.subr.bf16.mxu0 0
    %331 = vmatpush1.bf16.msra.mxu0 %v234
    %332 = vmatprep.subr.bf16.mxu0 0
    %333 = vmatpush1.bf16.msra.mxu0 %v233
    %334 = vmatprep.subr.bf16.mxu0 0
    %335 = vmatpush1.bf16.msra.mxu0 %v232
    %336 = vmatprep.subr.bf16.mxu0 0
    %337 = vmatpush2.bf16.msra.mxu0 0
    %338 = vmatprep.subr.bf16.mxu0 0
    %339 = vmatpush2.bf16.msra.mxu0 0
    %340 = vmatprep.subr.bf16.mxu0 0
    %341 = vmatpush2.bf16.msra.mxu0 0
    %342 = vmatprep.subr.bf16.mxu0 0
    %343 = vmatpush2.bf16.msra.mxu0 0
    %344 = vmatprep.subr.bf16.mxu0 0
    %345 = vmatpush2.bf16.msra.mxu0 0
    %346 = vmatprep.subr.bf16.mxu0 0
    %347 = vmatpush2.bf16.msra.mxu0 0
    %348 = vmatprep.subr.bf16.mxu0 0
    %349 = vmatpush2.bf16.msra.mxu0 0
    %350 = vmatprep.subr.bf16.mxu0 0
    %351 = vmatpush2.bf16.msra.mxu0 0
    %352 = vmatprep.mubr.bf16.mxu0 0
    %353 = vmatmul.mubr.bf16.gmra.mxu0 %v312
    %v354 = vpop.f32.mrf.mxu0
    %v355 = vadd.f32 %v259, %v354
    %v356 = vpop.f32.mrf.mxu0
    %v357 = vpop.f32.mrf.mxu0
    %v358 = vadd.f32 %v264, %v357
    %v359 = vpop.f32.mrf.mxu0
    %360 = vmatprep.mubr.bf16.mxu0 0
    %361 = vmatmul.mubr.bf16.gmra.mxu0 %v313
    %v362 = vpop.f32.mrf.mxu0
    %v363 = vadd.f32 %v269, %v362
    %v364 = vpop.f32.mrf.mxu0
    %v365 = vpop.f32.mrf.mxu0
    %v366 = vadd.f32 %v274, %v365
    %v367 = vpop.f32.mrf.mxu0
    %368 = vmatprep.mubr.bf16.mxu0 0
    %369 = vmatmul.mubr.bf16.gmra.mxu0 %v314
    %v370 = vpop.f32.mrf.mxu0
    %v371 = vadd.f32 %v279, %v370
    %v372 = vpop.f32.mrf.mxu0
    %v373 = vpop.f32.mrf.mxu0
    %v374 = vadd.f32 %v284, %v373
    %v375 = vpop.f32.mrf.mxu0
    %376 = vmatprep.mubr.bf16.mxu0 0
    %377 = vmatmul.mubr.bf16.gmra.mxu0 %v315
    %v378 = vpop.f32.mrf.mxu0
    %v379 = vadd.f32 %v289, %v378
    %v380 = vpop.f32.mrf.mxu0
    %v381 = vpop.f32.mrf.mxu0
    %v382 = vadd.f32 %v294, %v381
    %v383 = vpop.f32.mrf.mxu0
    %384 = vdwg.mxu0
    %v385 = vmax.f32 %v355, 0.0
    %v386 = vmax.f32 %v358, 0.0
    %v387 = vmax.f32 %v363, 0.0
    %v388 = vmax.f32 %v366, 0.0
    %v389 = vmax.f32 %v371, 0.0
    %v390 = vmax.f32 %v374, 0.0
    %v391 = vmax.f32 %v379, 0.0
    %v392 = vmax.f32 %v382, 0.0
    %v393 = vpack.c.bf16 %v386, %v385
    %v394 = vpack.c.bf16 %v388, %v387
    %v395 = vpack.c.bf16 %v390, %v389
    %v396 = vpack.c.bf16 %v392, %v391
    %v397 = vld [vmem:[%s4] sm:$0xf]
    %v398 = vld [vmem:[%s4 + $0x4] sm:$0xf]
    %v399 = vld [vmem:[%s4 + $0x8] sm:$0xf]
    %v400 = vld [vmem:[%s4 + $0xc] sm:$0xf]
    %v401 = vld [vmem:[%s4 + $0x10] sm:$0xf]
    %v402 = vld [vmem:[%s4 + $0x14] sm:$0xf]
    %v403 = vld [vmem:[%s4 + $0x18] sm:$0xf]
    %v404 = vld [vmem:[%s4 + $0x1c] sm:$0xf]
    %v405 = vld [vmem:[%s5] sm:$0xff]
    %v406 = vld [vmem:[%s5 + $0x8] sm:$0xff]
    %v407 = vld [vmem:[%s5 + $0x10] sm:$0xff]
    %v408 = vld [vmem:[%s5 + $0x18] sm:$0xff]
    %v409 = vld [vmem:[%s5 + $0x20] sm:$0xff]
    %v410 = vld [vmem:[%s5 + $0x28] sm:$0xff]
    %v411 = vld [vmem:[%s5 + $0x30] sm:$0xff]
    %v412 = vld [vmem:[%s5 + $0x38] sm:$0xff]
    %414 = vset.pattern.permute.xlu0 0
    %415 = vperm.xlu0 %414, %v405
    %v416 = vpop.permute.xlu0 %415
    %419 = vset.pattern.permute.xlu0 0
    %420 = vperm.xlu0 %419, %v406
    %v421 = vpop.permute.xlu0 %420
    %424 = vset.pattern.permute.xlu0 0
    %425 = vperm.xlu0 %424, %v407
    %v426 = vpop.permute.xlu0 %425
    %429 = vset.pattern.permute.xlu0 0
    %430 = vperm.xlu0 %429, %v408
    %v431 = vpop.permute.xlu0 %430
    %434 = vset.pattern.permute.xlu0 0
    %435 = vperm.xlu0 %434, %v409
    %v436 = vpop.permute.xlu0 %435
    %439 = vset.pattern.permute.xlu0 0
    %440 = vperm.xlu0 %439, %v410
    %v441 = vpop.permute.xlu0 %440
    %444 = vset.pattern.permute.xlu0 0
    %445 = vperm.xlu0 %444, %v411
    %v446 = vpop.permute.xlu0 %445
    %449 = vset.pattern.permute.xlu0 0
    %450 = vperm.xlu0 %449, %v412
    %v451 = vpop.permute.xlu0 %450
    %v461 = vunpack.c.l.b16 %v397
    %v462 = vunpack.c.l.b16 %v398
    %v463 = vunpack.c.l.b16 %v399
    %v464 = vunpack.c.l.b16 %v400
    %v465 = vunpack.c.l.b16 %v401
    %v466 = vunpack.c.l.b16 %v402
    %v467 = vunpack.c.l.b16 %v403
    %v468 = vunpack.c.l.b16 %v404
    %v469 = vpack.c.b16 %v462, %v461
    %v470 = vpack.c.b16 %v464, %v463
    %v471 = vpack.c.b16 %v466, %v465
    %v472 = vpack.c.b16 %v468, %v467
    %vm473 = vcmask 523264
    %v475 = vsel %vm473, %v469, 0
    %v478 = vsel %vm473, %v470, 0
    %v481 = vsel %vm473, %v471, 0
    %v484 = vsel %vm473, %v472, 0
    %486 = vmatprep.subr.bf16.mxu0 0
    %487 = vmatpush1.bf16.msra.mxu0 0
    %488 = vmatprep.subr.bf16.mxu0 0
    %489 = vmatpush1.bf16.msra.mxu0 0
    %490 = vmatprep.subr.bf16.mxu0 0
    %491 = vmatpush1.bf16.msra.mxu0 0
    %492 = vmatprep.subr.bf16.mxu0 0
    %493 = vmatpush1.bf16.msra.mxu0 0
    %494 = vmatprep.subr.bf16.mxu0 0
    %495 = vmatpush1.bf16.msra.mxu0 %v396
    %496 = vmatprep.subr.bf16.mxu0 0
    %497 = vmatpush1.bf16.msra.mxu0 %v395
    %498 = vmatprep.subr.bf16.mxu0 0
    %499 = vmatpush1.bf16.msra.mxu0 %v394
    %500 = vmatprep.subr.bf16.mxu0 0
    %501 = vmatpush1.bf16.msra.mxu0 %v393
    %502 = vmatprep.subr.bf16.mxu0 0
    %503 = vmatpush2.bf16.msra.mxu0 0
    %504 = vmatprep.subr.bf16.mxu0 0
    %505 = vmatpush2.bf16.msra.mxu0 0
    %506 = vmatprep.subr.bf16.mxu0 0
    %507 = vmatpush2.bf16.msra.mxu0 0
    %508 = vmatprep.subr.bf16.mxu0 0
    %509 = vmatpush2.bf16.msra.mxu0 0
    %510 = vmatprep.subr.bf16.mxu0 0
    %511 = vmatpush2.bf16.msra.mxu0 0
    %512 = vmatprep.subr.bf16.mxu0 0
    %513 = vmatpush2.bf16.msra.mxu0 0
    %514 = vmatprep.subr.bf16.mxu0 0
    %515 = vmatpush2.bf16.msra.mxu0 0
    %516 = vmatprep.subr.bf16.mxu0 0
    %517 = vmatpush2.bf16.msra.mxu0 0
    %518 = vmatprep.mubr.bf16.mxu0 0
    %519 = vmatmul.mubr.bf16.gmra.mxu0 %v475
    %v520 = vpop.f32.mrf.mxu0
    %v521 = vadd.f32 %v416, %v520
    %v522 = vpop.f32.mrf.mxu0
    %v523 = vpop.f32.mrf.mxu0
    %v524 = vadd.f32 %v421, %v523
    %v525 = vpop.f32.mrf.mxu0
    %526 = vmatprep.mubr.bf16.mxu0 0
    %527 = vmatmul.mubr.bf16.gmra.mxu0 %v478
    %v528 = vpop.f32.mrf.mxu0
    %v529 = vadd.f32 %v426, %v528
    %v530 = vpop.f32.mrf.mxu0
    %v531 = vpop.f32.mrf.mxu0
    %v532 = vadd.f32 %v431, %v531
    %v533 = vpop.f32.mrf.mxu0
    %534 = vmatprep.mubr.bf16.mxu0 0
    %535 = vmatmul.mubr.bf16.gmra.mxu0 %v481
    %v536 = vpop.f32.mrf.mxu0
    %v537 = vadd.f32 %v436, %v536
    %v538 = vpop.f32.mrf.mxu0
    %v539 = vpop.f32.mrf.mxu0
    %v540 = vadd.f32 %v441, %v539
    %v541 = vpop.f32.mrf.mxu0
    %542 = vmatprep.mubr.bf16.mxu0 0
    %543 = vmatmul.mubr.bf16.gmra.mxu0 %v484
    %v544 = vpop.f32.mrf.mxu0
    %v545 = vadd.f32 %v446, %v544
    %v546 = vpop.f32.mrf.mxu0
    %v547 = vpop.f32.mrf.mxu0
    %v548 = vadd.f32 %v451, %v547
    %v549 = vpop.f32.mrf.mxu0
    %550 = vdwg.mxu0
    %v551 = vmax.f32 %v521, 0.0
    %v552 = vmax.f32 %v524, 0.0
    %v553 = vmax.f32 %v529, 0.0
    %v554 = vmax.f32 %v532, 0.0
    %v555 = vmax.f32 %v537, 0.0
    %v556 = vmax.f32 %v540, 0.0
    %v557 = vmax.f32 %v545, 0.0
    %v558 = vmax.f32 %v548, 0.0
    %v559 = vld [vmem:[%s6] sm:$0xff]
    %v560 = vld [vmem:[%s6 + $0x8] sm:$0xff]
    %v561 = vld [vmem:[%s6 + $0x10] sm:$0xff]
    %v562 = vld [vmem:[%s6 + $0x18] sm:$0xff]
    %v563 = vld [vmem:[%s6 + $0x20] sm:$0xff]
    %v564 = vld [vmem:[%s6 + $0x28] sm:$0xff]
    %v565 = vld [vmem:[%s6 + $0x30] sm:$0xff]
    %v566 = vld [vmem:[%s6 + $0x38] sm:$0xff]
    %568 = vset.pattern.permute.xlu0 0
    %569 = vperm.xlu0 %568, %v559
    %v570 = vpop.permute.xlu0 %569
    %573 = vset.pattern.permute.xlu0 0
    %574 = vperm.xlu0 %573, %v560
    %v575 = vpop.permute.xlu0 %574
    %578 = vset.pattern.permute.xlu0 0
    %579 = vperm.xlu0 %578, %v561
    %v580 = vpop.permute.xlu0 %579
    %583 = vset.pattern.permute.xlu0 0
    %584 = vperm.xlu0 %583, %v562
    %v585 = vpop.permute.xlu0 %584
    %588 = vset.pattern.permute.xlu0 0
    %589 = vperm.xlu0 %588, %v563
    %v590 = vpop.permute.xlu0 %589
    %593 = vset.pattern.permute.xlu0 0
    %594 = vperm.xlu0 %593, %v564
    %v595 = vpop.permute.xlu0 %594
    %598 = vset.pattern.permute.xlu0 0
    %599 = vperm.xlu0 %598, %v565
    %v600 = vpop.permute.xlu0 %599
    %603 = vset.pattern.permute.xlu0 0
    %604 = vperm.xlu0 %603, %v566
    %v605 = vpop.permute.xlu0 %604
    %v607 = vmul.f32 %v551, %v570
    %v608 = vmul.f32 %v552, %v575
    %v609 = vmul.f32 %v553, %v580
    %v610 = vmul.f32 %v554, %v585
    %v611 = vmul.f32 %v555, %v590
    %v612 = vmul.f32 %v556, %v595
    %v613 = vmul.f32 %v557, %v600
    %v614 = vmul.f32 %v558, %v605
    %v615 = vadd.f32 %v607, %v608
    %v616 = vadd.f32 %v615, %v609
    %v617 = vadd.f32 %v616, %v610
    %v618 = vadd.f32 %v617, %v611
    %v619 = vadd.f32 %v618, %v612
    %v620 = vadd.f32 %v619, %v613
    %v621 = vadd.f32 %v620, %v614
    %v622 = vrot.slane %v621, 4
    %v623 = vadd.f32 %v621, %v622
    %v624 = vrot.slane %v623, 2
    %v625 = vadd.f32 %v623, %v624
    %v626 = vrot.slane %v625, 1
    %v627 = vadd.f32 %v625, %v626
    %s628 = sld [smem:[#allocation2]]
    %v629 = vstv %s628
    %v630 = vadd.f32 %v627, %v629
    %631 = vst [vmem:[#allocation3] sm:$0x1] %v630
    // Predicated region
    $region34: #{tpu_custom_call.1} parent=1 // pred_check
      _
    $region35: #{tpu_custom_call.1} parent=1 // pred_check_branch
      %633 = sbr.rel (0) target = $region37
    $region36: #{tpu_custom_call.1} parent=1 // pred_region
      %s635 = ssub.s32 16, 16
      %636 = vsyncadd [#allocation4], %s635
      %s638 = sshll.u32 [#allocation3], 4
      %s639 = int_to_ptr.vmem [resolvable:$true] %s638
      %641 = dma.vmem_to_hbm [thread:$0]  %s639, 16, %s8, [#allocation4]
    $region37: #{tpu_custom_call.1} parent=1 // pred_fallthru
      _
    // Predicated region
    $region38: #{tpu_custom_call.1} parent=1 // pred_check
      _
    $region39: #{tpu_custom_call.1} parent=1 // pred_check_branch
      %643 = sbr.rel (0) target = $region41
    $region40: #{tpu_custom_call.1} parent=1 // pred_region
      %644 = dma.done [#allocation4], 16
    $region41: #{tpu_custom_call.1} parent=1 // pred_fallthru
      _
    %645 = vsyncpa [#allocation4], 1

</llo_original>
